<compile_context>
chip_gen: v5e
topology: v5e:2x2
jax: 0.10.0
libtpu: 0.0.40
codegen_flags: <defaults>
</compile_context>

<pallas_src>
import functools

import numpy as np

import jax
import jax.numpy as jnp
from jax.experimental import pallas as pl
from jax.experimental.pallas import tpu as pltpu

SOS = "<s>"
_MIB = 1024 * 1024
_DMA_WINDOW = 8          # max in-flight row DMAs per grid step (gather path)

# Flipped to False (once) if this jax build rejects pipeline_mode=pl.Buffered(1).
_SINGLE_BUFFER_TABLE_OK = True


def _round_up(x, m):
    return ((x + m - 1) // m) * m


@functools.lru_cache(maxsize=None)
def _vmem_limit_bytes():
    """Scoped-VMEM budget derived from hardware (64 MiB v7x, 128 MiB v5e/v6e)."""
    try:
        cap = int(pltpu.get_tpu_info().vmem_capacity_bytes)
    except Exception:
        cap = 64 * _MIB          # conservative default that fits every generation
    return int(min(cap * 3 // 4, 100 * _MIB))


# ---------------------------------------------------------------------------
# Path A: small vocabulary — resident table + one-hot MXU gather
# ---------------------------------------------------------------------------
def _onehot_gather_kernel(ids_ref, table_ref, out_ref):
    """out[t, :] = table[ids[t], :] as a one-hot matmul on the MXU.

    ids_ref   : (1, tile_t)        int32 token ids (lane-major)
    table_ref : (n_V_pad, tile_e)  resident embedding-table chunk (VMEM)
    out_ref   : (tile_t, tile_e)
    """
    n_v = table_ref.shape[0]
    tile_t = out_ref.shape[0]
    ids = ids_ref[...]                                              # (1, tile_t)
    vocab = jax.lax.broadcasted_iota(jnp.int32, (n_v, tile_t), 0)   # sublanes = vocab id
    one_hot = (vocab == ids).astype(table_ref.dtype)                # (n_v, tile_t)
    # Contract dim 0 of both operands (one-hot is built transposed so the ids
    # stay lane-major); f32 accumulation makes this an exact gather of the
    # stored bf16 rows.
    acc = jax.lax.dot_general(
        one_hot, table_ref[...],
        dimension_numbers=(((0,), (0,)), ((), ())),
        preferred_element_type=jnp.float32)                         # (tile_t, tile_e)
    out_ref[...] = acc.astype(out_ref.dtype)


@functools.lru_cache(maxsize=None)
def _build_onehot_lookup(orig_shape, n_tok, n_rows_pad, emb_pad, emb, n_valid,
                         table_dtype, out_dtype, tile_t, tile_e, single_buffer):
    del table_dtype                      # part of the cache key only
    out_dtype = jnp.dtype(out_dtype)
    n_t_tiles = pl.cdiv(n_tok, tile_t)
    n_e_tiles = pl.cdiv(emb_pad, tile_e)
    n_ids_pad = n_t_tiles * tile_t

    table_spec_kwargs = {}
    if single_buffer:
        # Constant block index along the (inner) token axis -> double buffering
        # of the table chunk only wastes VMEM.
        table_spec_kwargs["pipeline_mode"] = pl.Buffered(1)

    call = pl.pallas_call(
        _onehot_gather_kernel,
        out_shape=jax.ShapeDtypeStruct((n_tok, emb_pad), out_dtype),
        grid=(n_e_tiles, n_t_tiles),     # emb chunks OUTER (v7x megacore lands here)
        in_specs=[
            # Lane-major ids: a dense (1, tile_t) copy per step.
            pl.BlockSpec((1, tile_t), lambda e, t: (0, t)),
            # Table chunk: resident across all token tiles of this emb chunk.
            pl.BlockSpec((n_rows_pad, tile_e), lambda e, t: (0, e),
                         **table_spec_kwargs),
        ],
        out_specs=pl.BlockSpec((tile_t, tile_e), lambda e, t: (t, e)),
        compiler_params=pltpu.CompilerParams(
            dimension_semantics=("parallel", "parallel"),
            vmem_limit_bytes=_vmem_limit_bytes()),
    )

    @jax.jit
    def lookup(ids_flat, table_padded):
        ids = jnp.clip(ids_flat.astype(jnp.int32), 0, n_valid - 1)
        ids = jnp.pad(ids, (0, n_ids_pad - n_tok)).reshape(1, n_ids_pad)
        out = call(ids, table_padded)
        if emb_pad != emb:               # only when emb % 128 != 0
            out = out[:, :emb]
        return out.reshape(orig_shape + (emb,))

    return lookup


# ---------------------------------------------------------------------------
# Path B: large vocabulary — scalar-prefetched ids + per-row HBM->VMEM DMA
# ---------------------------------------------------------------------------
def _gather_rows_dma(ids_ref, table_ref, dst_ref, sem):
    """DMA table rows ids[base + i] (HBM) -> dst[i] (VMEM), windowed/overlapped."""
    tile_t = dst_ref.shape[0]
    base = pl.program_id(0) * tile_t
    window = min(_DMA_WINDOW, tile_t)

    def start_copy(i):
        row = ids_ref[base + i]
        pltpu.make_async_copy(
            table_ref.at[pl.ds(row, 1), :],
            dst_ref.at[pl.ds(i, 1), :],
            sem,
        ).start()

    def wait_one():
        # All row copies have identical size, so waiting with a same-shaped
        # (dummy-indexed) descriptor retires exactly one outstanding copy.
        pltpu.make_async_copy(
            table_ref.at[pl.ds(0, 1), :],
            dst_ref.at[pl.ds(0, 1), :],
            sem,
        ).wait()

    def prime(i, carry):
        start_copy(i)
        return carry

    def steady(i, carry):
        wait_one()
        start_copy(i)
        return carry

    def drain(i, carry):
        wait_one()
        return carry

    jax.lax.fori_loop(0, window, prime, 0, unroll=True)
    jax.lax.fori_loop(window, tile_t, steady, 0)
    jax.lax.fori_loop(0, window, drain, 0, unroll=True)


def _make_dma_gather_kernel(needs_cast):
    if needs_cast:
        def kernel(ids_ref, table_ref, out_ref, row_buf, sem):
            _gather_rows_dma(ids_ref, table_ref, row_buf, sem.at[0])
            out_ref[...] = row_buf[...].astype(out_ref.dtype)
    else:
        def kernel(ids_ref, table_ref, out_ref, sem):
            _gather_rows_dma(ids_ref, table_ref, out_ref, sem.at[0])
    return kernel


@functools.lru_cache(maxsize=None)
def _build_dma_gather_lookup(orig_shape, n_tok, emb_pad, emb, n_valid,
                             table_dtype, out_dtype, tile_t):
    table_dtype = jnp.dtype(table_dtype)
    out_dtype = jnp.dtype(out_dtype)
    needs_cast = out_dtype != table_dtype
    n_t_tiles = pl.cdiv(n_tok, tile_t)
    n_ids_pad = n_t_tiles * tile_t

    scratch_shapes = []
    if needs_cast:
        scratch_shapes.append(pltpu.VMEM((tile_t, emb_pad), table_dtype))
    scratch_shapes.append(pltpu.SemaphoreType.DMA((1,)))

    grid_spec = pltpu.PrefetchScalarGridSpec(
        num_scalar_prefetch=1,                          # ids -> SMEM
        grid=(n_t_tiles,),
        in_specs=[pl.BlockSpec(memory_space=pl.ANY)],   # table stays in HBM
        out_specs=pl.BlockSpec((tile_t, emb_pad), lambda t, ids: (t, 0)),
        scratch_shapes=scratch_shapes,
    )
    call = pl.pallas_call(
        _make_dma_gather_kernel(needs_cast),
        out_shape=jax.ShapeDtypeStruct((n_tok, emb_pad), out_dtype),
        grid_spec=grid_spec,
        compiler_params=pltpu.CompilerParams(
            dimension_semantics=("parallel",),
            vmem_limit_bytes=_vmem_limit_bytes()),
    )

    @jax.jit
    def lookup(ids_flat, table_padded):
        ids = jnp.clip(ids_flat.astype(jnp.int32), 0, n_valid - 1)
        ids = jnp.pad(ids, (0, n_ids_pad - n_tok))      # pad with a valid row id (0)
        out = call(ids, table_padded)
        if emb_pad != emb:
            out = out[:, :emb]
        return out.reshape(orig_shape + (emb,))

    return lookup


# ---------------------------------------------------------------------------
# Public wrapper
# ---------------------------------------------------------------------------
def embedding_lookup(ids, table, *, n_valid_rows=None, valid_cols=None,
                     out_dtype=None, tile_t=512, onehot_vocab_limit=1024):
    """out[..., :] = table[ids[...], :].astype(out_dtype).

    `table` may be the raw (n_V, emb) table or an already layout-padded one
    (rows % 8 == 0, cols % 128 == 0) with `n_valid_rows` / `valid_cols` giving
    the logical sizes (how EmbeddingLayerPallas calls it, so no per-call pad).
    Out-of-range ids are clamped.  # TODO(synk): nn.Embedding raises instead.
    """
    global _SINGLE_BUFFER_TABLE_OK

    ids = jnp.asarray(ids)
    table = jnp.asarray(table)
    n_rows, n_cols = (int(table.shape[0]), int(table.shape[1]))
    n_valid = int(n_valid_rows) if n_valid_rows is not None else n_rows
    emb = int(valid_cols) if valid_cols is not None else n_cols
    table_dtype = jnp.dtype(table.dtype)
    out_dtype = jnp.dtype(out_dtype) if out_dtype is not None else table_dtype

    # Layout-pad the table only if the caller handed an unpadded one (the
    # module pre-pads once at __init__, so this is skipped on the hot path).
    n_rows_pad = _round_up(n_rows, 8)
    emb_pad = _round_up(n_cols, 128)
    if (n_rows_pad, emb_pad) != (n_rows, n_cols):
        table = (jnp.zeros((n_rows_pad, emb_pad), table_dtype)
                 .at[:n_rows, :n_cols].set(table))

    orig_shape = tuple(int(d) for d in ids.shape)
    n_tok = int(np.prod(orig_shape, dtype=np.int64)) if orig_shape else 1
    if n_tok == 0:
        return jnp.zeros(orig_shape + (emb,), out_dtype)
    ids_flat = ids.reshape(-1)

    vmem_limit = _vmem_limit_bytes()
    table_itemsize = table_dtype.itemsize
    out_itemsize = out_dtype.itemsize
    # Per-buffer budgets, conservative enough even if everything ends up
    # double-buffered: table <= 1/4, each of the two output buffers <= 1/8.
    table_buf_budget = vmem_limit // 4
    out_buf_budget = vmem_limit // 8

    max_e_table = (table_buf_budget // max(n_rows_pad * table_itemsize, 1)) // 128 * 128
    use_onehot = (n_rows_pad <= int(onehot_vocab_limit)) and (max_e_table >= 128)

    if use_onehot:
        # ---- small vocab: resident table + one-hot MXU gather --------------
        tile_t_eff = max(8, min(int(tile_t), _round_up(n_tok, 8)))
        if tile_t_eff < n_tok:           # multi-tile => ids lane-dim constraint
            tile_t_eff = max(128, tile_t_eff // 128 * 128)
        max_e_out = (out_buf_budget // max(tile_t_eff * out_itemsize, 1)) // 128 * 128
        tile_e = max(128, min(emb_pad, max_e_table, max_e_out))

        table_chunk_bytes = n_rows_pad * tile_e * table_itemsize
        single_buffer = _SINGLE_BUFFER_TABLE_OK and table_chunk_bytes >= 2 * _MIB

        args = (orig_shape, n_tok, n_rows_pad, emb_pad, emb, n_valid,
                table_dtype.name, out_dtype.name, tile_t_eff, tile_e)
        try:
            fn = _build_onehot_lookup(*args, single_buffer)
            return fn(ids_flat, table)
        except Exception:
            if not single_buffer:
                raise
            # pipeline_mode=pl.Buffered(1) rejected by this jax build — fall
            # back to default buffering (once) and remember.
            _SINGLE_BUFFER_TABLE_OK = False
            fn = _build_onehot_lookup(*args, False)
            return fn(ids_flat, table)

    # ---- large vocab: scalar-prefetched ids + per-row HBM DMA gather --------
    # TODO(synk): for very long token streams (>~64K tokens) chunk the call so
    # the scalar-prefetched ids stay comfortably inside SMEM.
    bytes_per_tok = emb_pad * (2 * out_itemsize
                               + (table_itemsize if out_dtype != table_dtype else 0))
    max_t_budget = max(8, (vmem_limit // 3) // max(bytes_per_tok, 1) // 8 * 8)
    tile_t_eff = max(8, min(int(tile_t), _round_up(n_tok, 8), max_t_budget) // 8 * 8)
    fn = _build_dma_gather_lookup(orig_shape, n_tok, emb_pad, emb, n_valid,
                                  table_dtype.name, out_dtype.name, tile_t_eff)
    return fn(ids_flat, table)


# ---------------------------------------------------------------------------
# Module port
# ---------------------------------------------------------------------------
class EmbeddingLayerPallas:
    """JAX/Pallas port of EmbeddingLayer (vocab bookkeeping + embedding lookup)."""

    def __init__(self, emb_size, words, sos=SOS, fix_emb=False, key=None,
                 param_dtype=jnp.bfloat16, tile_t=512, onehot_vocab_limit=1024):
        word2id, id2word = {}, {}
        if sos not in word2id:
            word2id[sos] = len(word2id)
            id2word[word2id[sos]] = sos
        for w in words:
            if w not in word2id:
                word2id[w] = len(word2id)
                id2word[word2id[w]] = w
        self.word2id, self.id2word = word2id, id2word
        self.n_V, self.emb_size = len(word2id), emb_size
        self.sosid = word2id[sos]
        self.fix_emb = fix_emb           # kept for signature parity (forward-only port)
        self._tile_t = tile_t
        self._onehot_vocab_limit = onehot_vocab_limit

        if key is None:
            key = jax.random.PRNGKey(0)
        # nn.Embedding default init: weight ~ N(0, 1).  Stored bf16 (the lookup
        # is memory bound) and pre-padded ONCE to the (8, 128)-aligned layout
        # both kernel paths consume, so forward never rewrites the table.
        w = jax.random.normal(key, (self.n_V, emb_size), jnp.float32).astype(param_dtype)
        n_V_pad = _round_up(self.n_V, 8)
        emb_pad = _round_up(emb_size, 128)
        if (n_V_pad, emb_pad) == (self.n_V, emb_size):
            self.weight_padded = w
        else:
            self.weight_padded = (jnp.zeros((n_V_pad, emb_pad), param_dtype)
                                  .at[:self.n_V, :emb_size].set(w))

    @property
    def weight(self):
        """Logical (n_V, emb_size) view of the stored (padded) table."""
        return self.weight_padded[:self.n_V, :self.emb_size]

    def forward(self, x):
        return embedding_lookup(
            x, self.weight_padded,
            n_valid_rows=self.n_V, valid_cols=self.emb_size,
            tile_t=self._tile_t, onehot_vocab_limit=self._onehot_vocab_limit)

    __call__ = forward

    def map_to_ids(self, text):
        return jnp.asarray([self.word2id[t] for t in text], dtype=jnp.int32)

    def map_to_tokens(self, ids):
        return [self.id2word[int(i)] for i in np.asarray(ids).reshape(-1)]


if __name__ == "__main__":
    key = jax.random.PRNGKey(0)
    k_emb, k_ids1, k_ids2, k_tab, k_ids3 = jax.random.split(key, 5)

    # ---- Path A: small vocab -> resident-table one-hot MXU gather ----------
    words = [f"w{i}" for i in range(15)]            # + SOS -> n_V = 16
    emb_size = 128
    layer = EmbeddingLayerPallas(emb_size, words, key=k_emb)

    x1 = jax.random.randint(k_ids1, (2, 8), 0, layer.n_V, dtype=jnp.int32)
    out1 = jax.block_until_ready(layer(x1))
    ref1 = layer.weight[x1]
    assert out1.shape == (2, 8, emb_size)
    assert out1.dtype == layer.weight_padded.dtype
    assert jnp.array_equal(out1, ref1), "one-hot path mismatch (x1)"

    # Multi-token-tile grid + partial (masked) last tile.
    x2 = jax.random.randint(k_ids2, (3, 300), 0, layer.n_V, dtype=jnp.int32)
    out2 = jax.block_until_ready(layer(x2))
    ref2 = layer.weight[x2]
    assert out2.shape == (3, 300, emb_size)
    assert jnp.array_equal(out2, ref2), "one-hot path mismatch (x2)"

    # ---- Path B: large vocab -> scalar-prefetch ids + per-row DMA gather ----
    big_table = jax.random.normal(k_tab, (1500, 160), jnp.float32).astype(jnp.bfloat16)
    x3 = jax.random.randint(k_ids3, (2, 37), 0, 1500, dtype=jnp.int32)

    out3 = jax.block_until_ready(embedding_lookup(x3, big_table))
    assert out3.shape == (2, 37, 160)
    assert jnp.array_equal(out3, big_table[x3]), "DMA-gather path mismatch (bf16)"

    out4 = jax.block_until_ready(
        embedding_lookup(x3, big_table, out_dtype=jnp.float32))
    assert out4.shape == (2, 37, 160) and out4.dtype == jnp.float32
    assert jnp.array_equal(out4, big_table[x3].astype(jnp.float32)), \
        "DMA-gather path mismatch (f32 cast)"

    print("KERNEL_OK")
</pallas_src>

<mosaic_0001>
module attributes {stable_mosaic.version = 11 : i64} {
  func.func @_onehot_gather_kernel(%arg0: i32, %arg1: i32, %arg2: memref<1x16xi32, #tpu.memory_space<vmem>>, %arg3: memref<16x128xbf16, #tpu.memory_space<vmem>>, %arg4: memref<16x128xbf16, #tpu.memory_space<vmem>>) attributes {dimension_semantics = [#tpu.dimension_semantics<parallel>, #tpu.dimension_semantics<parallel>], iteration_bounds = array<i64: 1, 1>, scalar_prefetch = 0 : i64, scratch_operands = 0 : i64, tpu.core_type = #tpu.core_type<tc>, window_params = [{transform_indices = @transform_0, window_bounds = array<i64: 1, 16>}, {transform_indices = @transform_1, window_bounds = array<i64: 16, 128>}, {transform_indices = @transform_2, window_bounds = array<i64: 16, 128>}]} {
    %c0 = arith.constant 0 : index
    %c0_0 = arith.constant 0 : index
    %0 = vector.load %arg2[%c0, %c0_0] : memref<1x16xi32, #tpu.memory_space<vmem>>, vector<1x16xi32>
    %1 = tpu.iota {dimensions = array<i32: 0>} : vector<16x16xi32>
    %2 = vector.broadcast %0 : vector<1x16xi32> to vector<16x16xi32>
    %3 = arith.cmpi eq, %1, %2 : vector<16x16xi32>
    %4 = arith.extui %3 : vector<16x16xi1> to vector<16x16xi32>
    %5 = arith.sitofp %4 : vector<16x16xi32> to vector<16x16xf32>
    %6 = arith.truncf %5 : vector<16x16xf32> to vector<16x16xbf16>
    %c0_1 = arith.constant 0 : index
    %c0_2 = arith.constant 0 : index
    %7 = vector.load %arg3[%c0_1, %c0_2] : memref<16x128xbf16, #tpu.memory_space<vmem>>, vector<16x128xbf16>
    %cst = arith.constant dense<0.000000e+00> : vector<16x128xf32>
    %8 = tpu.matmul %6, %7, %cst {dimension_numbers = #tpu.dot_dimension_numbers<[0], [0], [1], [1], [0, 1, 1, 1], [], []>} : vector<16x16xbf16>, vector<16x128xbf16>, vector<16x128xf32> -> vector<16x128xf32>
    %9 = arith.truncf %8 : vector<16x128xf32> to vector<16x128xbf16>
    %c0_3 = arith.constant 0 : index
    %c0_4 = arith.constant 0 : index
    %10 = vector.load %arg4[%c0_3, %c0_4] : memref<16x128xbf16, #tpu.memory_space<vmem>>, vector<16x128xbf16>
    tpu.vector_store %arg4[%c0_3, %c0_4], %9 {strides = array<i32>} : memref<16x128xbf16, #tpu.memory_space<vmem>>, vector<16x128xbf16>,
    return
  }
  func.func @transform_0(%arg0: i32, %arg1: i32) -> (i32, i32) {
    %c0_i32 = arith.constant 0 : i32
    %c0_i32_0 = arith.constant 0 : i32
    return %c0_i32, %arg1 : i32, i32
  }
  func.func @transform_1(%arg0: i32, %arg1: i32) -> (i32, i32) {
    %c0_i32 = arith.constant 0 : i32
    %c0_i32_0 = arith.constant 0 : i32
    return %c0_i32, %arg0 : i32, i32
  }
  func.func @transform_2(%arg0: i32, %arg1: i32) -> (i32, i32) {
    %c0_i32 = arith.constant 0 : i32
    return %arg1, %arg0 : i32, i32
  }
}

</mosaic_0001>

<llo_original>
// kernel: lookup.1
$region0: #{lookup.1}
  #allocation0 [shape = 'u32[]', space=smem, size = 0x4, offset = 0x4, fixed_abs, tag = 'smem constant byte address 0x4 - core index']
  #allocation1 [shape = 'u32[72,128]{1,0:T(1,128)}', space=vmem, size = 0x9000, scoped, tag = 'internal scratch']
  %s0 = inlined_call_operand.vmem [shape: s32[1,16], index: 0, kind: input, shape index: {}]
  %s1 = inlined_call_operand.hbm [shape: bf16[16,128], index: 1, kind: input, shape index: {}]
  %s2 = inlined_call_operand.hbm [shape: bf16[16,128], index: 2, kind: output, shape index: {}]
  %s3 = sld [smem:[#allocation0]]
  $region22: #{lookup.1} parent=0
    _
  %s5 = ssub.s32 1, %s3
  %s6 = scalar_select 0, %s5, %s3
  $region1: #{lookup.1} parent=0
    #allocation2 [shape = 'u8[4096]{0}', space=vmem, size = 0x1000, scoped, tag = 'input window, operand 1, single buffered']
    #allocation3 [shape = 's32[1]{0}', space=sflag, size = 0x4, scoped, tag = 'scoped memory for lookup.1']
    #allocation4 [shape = 's32[1]{0}', space=sflag, size = 0x4, scoped, tag = 'scoped memory for lookup.1']
    #allocation5 [shape = 'u8[4096]{0}', space=vmem, size = 0x1000, scoped, tag = 'output window, operand 0, single buffered']
    %7 = vsyncpa [#allocation3], 0
    %8 = vsyncpa [#allocation4], 0
    // Predicated region
    $region2: #{lookup.1} parent=1 // pred_check
      _
    $region3: #{lookup.1} parent=1 // pred_check_branch
      %10 = sbr.rel (0) target = $region5
    $region4: #{lookup.1} parent=1 // pred_region
      _
    $region5: #{lookup.1} parent=1 // pred_fallthru
      _
    // Predicated region
    $region6: #{lookup.1} parent=1 // pred_check
      _
    $region7: #{lookup.1} parent=1 // pred_check_branch
      %12 = sbr.rel (0) target = $region9
    $region8: #{lookup.1} parent=1 // pred_region
      %14 = vsyncadd [#allocation3], 0
      %s15 = sshll.u32 %s1, 4
      %s16 = int_to_ptr.hbm [resolvable:$true] %s15
      %s17 = sshll.u32 [#allocation2], 4
      %s18 = int_to_ptr.vmem [resolvable:$true] %s17
      %23 = dma.hbm_to_vmem [thread:$0]  %s16, 128, %s18, [#allocation3], 64, 64, 4
    $region9: #{lookup.1} parent=1 // pred_fallthru
      _
    // Predicated region
    $region10: #{lookup.1} parent=1 // pred_check
      _
    $region11: #{lookup.1} parent=1 // pred_check_branch
      %25 = sbr.rel (0) target = $region13
    $region12: #{lookup.1} parent=1 // pred_region
      %27 = dma.done [#allocation3], 128
    $region13: #{lookup.1} parent=1 // pred_fallthru
      _
    %v29 = vld [vmem:[%s0] sm:$0x1]
    %v30 = vlaneseq
    %v31 = vshrl.u32 %v30, 7
    %v32 = vadd.s32 %v31, 8
    %v33 = vperm.slane %v29, 0
    %vm34 = vcmp.eq.s32.totalorder %v31, %v33
    %vm35 = vcmp.eq.s32.totalorder %v32, %v33
    %v36 = vsel %vm34, 1, 0
    %v37 = vsel %vm35, 1, 0
    %v38 = vcvt.s32.f32 %v36
    %v39 = vcvt.s32.f32 %v37
    %v40 = vpack.c.bf16 %v39, %v38
    %v41 = vld [vmem:[#allocation2] sm:$0xf]
    %v42 = vld [vmem:[#allocation2 + $0x4] sm:$0xf]
    %43 = vxpose.xlu0.c.b16.start [1/8] %v40, 128
    %44 = vxpose.xlu0.c.b16.cont [2/8] 0, 128
    %45 = vxpose.xlu0.c.b16.cont [3/8] 0, 128
    %46 = vxpose.xlu0.c.b16.cont [4/8] 0, 128
    %47 = vxpose.xlu0.c.b16.cont [5/8] 0, 128
    %48 = vxpose.xlu0.c.b16.cont [6/8] 0, 128
    %49 = vxpose.xlu0.c.b16.cont [7/8] 0, 128
    %50 = vxpose.xlu0.c.b16.end [8/8] 0, 128
    %v51 = vpop.trf.xlu0
    %v52 = vpop.trf.xlu0
    %v53 = vpop.trf.xlu0
    %v54 = vpop.trf.xlu0
    %v55 = vpop.trf.xlu0
    %v56 = vpop.trf.xlu0
    %v57 = vpop.trf.xlu0
    %v58 = vpop.trf.xlu0
    %v61 = vunpack.c.l.b16 %v41
    %v62 = vunpack.c.l.b16 %v42
    %v63 = vpack.c.b16 %v62, %v61
    %vm65 = vcmask 130048
    %v67 = vsel %vm65, %v51, 0
    %69 = vmatpush.bf16.msra.mxu0 0
    %70 = vmatpush.bf16.msra.mxu0 0
    %71 = vmatpush.bf16.msra.mxu0 0
    %72 = vmatpush.bf16.msra.mxu0 0
    %73 = vmatpush.bf16.msra.mxu0 0
    %74 = vmatpush.bf16.msra.mxu0 0
    %75 = vmatpush.bf16.msra.mxu0 0
    %76 = vmatpush.bf16.msra.mxu0 %v63
    %77 = vmatmul.bf16.gmra.mxu0 %v67
    %v78 = vpop.f32.mrf.mxu0
    %v79 = vadd.f32 0.0, %v78
    %v80 = vpop.f32.mrf.mxu0
    %v81 = vadd.f32 0.0, %v80
    %82 = vdwg.mxu0
    %v83 = vpack.c.bf16 %v79, %v79
    %v84 = vpack.c.bf16 %v81, %v81
    %85 = vst [vmem:[#allocation5] sm:$0xf] %v83
    %86 = vst [vmem:[#allocation5 + $0x4] sm:$0xf] %v84
    // Predicated region
    $region14: #{lookup.1} parent=1 // pred_check
      _
    $region15: #{lookup.1} parent=1 // pred_check_branch
      %88 = sbr.rel (0) target = $region17
    $region16: #{lookup.1} parent=1 // pred_region
      %90 = vsyncadd [#allocation4], 0
      %s91 = sshll.u32 [#allocation5], 4
      %s92 = int_to_ptr.vmem [resolvable:$true] %s91
      %s93 = sshll.u32 %s2, 4
      %s94 = int_to_ptr.hbm [resolvable:$true] %s93
      %99 = dma.vmem_to_hbm [thread:$0]  %s92, 128, %s94, [#allocation4], 64, 64, 4
    $region17: #{lookup.1} parent=1 // pred_fallthru
      _
    // Predicated region
    $region18: #{lookup.1} parent=1 // pred_check
      _
    $region19: #{lookup.1} parent=1 // pred_check_branch
      %101 = sbr.rel (0) target = $region21
    $region20: #{lookup.1} parent=1 // pred_region
      %103 = dma.done [#allocation4], 128
    $region21: #{lookup.1} parent=1 // pred_fallthru
      _
    %104 = vsyncpa [#allocation3], 1
    %105 = vsyncpa [#allocation4], 1

</llo_original>
